<compile_context>
chip_gen: v7x
topology: tpu7x:2x2x1
jax: 0.10.0
libtpu: 0.0.40
codegen_flags: <defaults>
</compile_context>

<pallas_src>
import jax
import jax.numpy as jnp
from jax.experimental import pallas as pl
from jax.experimental.pallas import tpu as pltpu

IN_FEATURES = 64
OUT_FEATURES = 512
DEFAULT_TM = 2048        # rows per tile (cap); multiple of 8 (f32 sublanes)
SMALL_B_FASTPATH = 256   # below this, XLA fusion beats kernel launch overhead


def _round_up(x, m):
    return ((x + m - 1) // m) * m


def _linear_bias_kernel(x_ref, w_ref, b_ref, o_ref):
    # (TM, 64) @ (64, 512) on the MXU with f32 accumulate, then one fused
    # broadcast bias-add (bias already includes `other`) on the VPU.
    acc = jnp.dot(x_ref[...], w_ref[...], preferred_element_type=jnp.float32)
    o_ref[...] = acc + b_ref[...]


def linear_add(x, w, b, other, *, tm=DEFAULT_TM, force_pallas=False):
    """Forward of the module.

    x:     (B, 64)   f32
    w:     (64, 512) f32  (transpose of PyTorch nn.Linear weight (512, 64))
    b:     (1, 512)  f32  Linear bias
    other: (1, 512)  f32  the free-global addend
    returns (B, 512) f32
    """
    B = x.shape[0]

    # Fold the two constants into one bias vector on the host (2 KiB add).
    fused_bias = (b + other).reshape(1, OUT_FEATURES).astype(jnp.float32)

    if not force_pallas and B < SMALL_B_FASTPATH:
        # Spec's primary case is B=1: 64 Kflops vs fixed pallas_call + 128 KiB
        # weight DMA overhead -> let XLA fuse the tiny GEMV + add instead.
        return x @ w + fused_bias

    tm = min(max(int(tm), 8), 2048)

    # Balanced tiling: pick tile count first, then the smallest multiple-of-8
    # tile that covers B -> at most 7 padded rows per tile.
    n_tiles = pl.cdiv(B, tm)
    if B >= 16:
        # Ensure >= 2 tiles so the "parallel" axis can use both v7x TCs.
        n_tiles = max(n_tiles, 2)
    tm_eff = _round_up(pl.cdiv(B, n_tiles), 8)
    n_tiles = pl.cdiv(B, tm_eff)
    b_pad = n_tiles * tm_eff
    x_in = x if b_pad == B else jnp.pad(x, ((0, b_pad - B), (0, 0)))

    # VMEM budget: double-buffered x tiles (64 lanes pad to 128) + out tiles,
    # plus resident weight (128 KiB) and fused bias (sublane-padded).
    vmem_bytes = (2 * tm_eff * 128 * 4
                  + 2 * tm_eff * OUT_FEATURES * 4
                  + 2 * IN_FEATURES * OUT_FEATURES * 4
                  + 2 * 8 * OUT_FEATURES * 4)
    vmem_bytes = max(vmem_bytes * 2, 4 << 20)   # 2x headroom, >= 4 MiB floor

    cost = pl.CostEstimate(
        flops=2 * b_pad * IN_FEATURES * OUT_FEATURES,
        bytes_accessed=(b_pad * IN_FEATURES * 4          # x read
                        + IN_FEATURES * OUT_FEATURES * 4  # weight read
                        + OUT_FEATURES * 4                # fused bias read
                        + b_pad * OUT_FEATURES * 4),      # out write
        transcendentals=0,
    )

    out = pl.pallas_call(
        _linear_bias_kernel,
        out_shape=jax.ShapeDtypeStruct((b_pad, OUT_FEATURES), jnp.float32),
        grid=(n_tiles,),
        in_specs=[
            # x: one batch tile per grid step.
            pl.BlockSpec((tm_eff, IN_FEATURES), lambda i: (i, 0)),
            # weight: constant block index -> fetched once, VMEM-resident.
            pl.BlockSpec((IN_FEATURES, OUT_FEATURES), lambda i: (0, 0)),
            # fused bias (b + other): constant, VMEM-resident.
            pl.BlockSpec((1, OUT_FEATURES), lambda i: (0, 0)),
        ],
        out_specs=pl.BlockSpec((tm_eff, OUT_FEATURES), lambda i: (i, 0)),
        compiler_params=pltpu.CompilerParams(
            # batch axis is independent -> shard across TensorCores (v7x).
            dimension_semantics=("parallel",),
            vmem_limit_bytes=int(vmem_bytes),
        ),
        cost_estimate=cost,
    )(x_in, w, fused_bias)

    return out[:B] if b_pad != B else out


if __name__ == "__main__":
    key = jax.random.PRNGKey(0)
    k_x, k_w, k_b, k_o = jax.random.split(key, 4)

    # Inputs / deterministic parameters (synthetic init, matching the spec:
    # x1 = torch.randn(1, 64), Linear(64, 512, bias=True), `other` constant).
    x1 = jax.random.normal(k_x, (1, IN_FEATURES), dtype=jnp.float32)
    # PyTorch nn.Linear weight is (out, in); store transposed as (in, out).
    w_t = jax.random.normal(k_w, (IN_FEATURES, OUT_FEATURES), dtype=jnp.float32) * 0.05
    b = jax.random.normal(k_b, (1, OUT_FEATURES), dtype=jnp.float32) * 0.05
    other = jax.random.normal(k_o, (1, OUT_FEATURES), dtype=jnp.float32)

    ref1 = x1 @ w_t + b + other

    # Primary spec case B=1 via the default dispatch (small-B XLA fast path).
    out_fast = linear_add(x1, w_t, b, other)
    jax.block_until_ready(out_fast)
    assert out_fast.shape == (1, OUT_FEATURES)
    assert jnp.allclose(out_fast, ref1, atol=1e-4, rtol=1e-4)

    # Same B=1 case forced through the Pallas kernel (pads to 8 rows, 1 tile).
    out_k1 = linear_add(x1, w_t, b, other, force_pallas=True)
    jax.block_until_ready(out_k1)
    assert out_k1.shape == (1, OUT_FEATURES)
    assert jnp.allclose(out_k1, ref1, atol=1e-4, rtol=1e-4)

    # Multi-tile grid path: B=20, tm=8 -> balanced 3 tiles of 8 rows, 4 pad rows.
    xb = jax.random.normal(jax.random.PRNGKey(1), (20, IN_FEATURES), dtype=jnp.float32)
    out_b = linear_add(xb, w_t, b, other, tm=8, force_pallas=True)
    jax.block_until_ready(out_b)
    ref_b = xb @ w_t + b + other
    assert out_b.shape == (20, OUT_FEATURES)
    assert jnp.allclose(out_b, ref_b, atol=1e-4, rtol=1e-4)

    print("KERNEL_OK")
</pallas_src>

<mosaic_0001>
module attributes {stable_mosaic.version = 11 : i64} {
  func.func @_linear_bias_kernel(%arg0: i32, %arg1: memref<8x64xf32, #tpu.memory_space<vmem>>, %arg2: memref<64x512xf32, #tpu.memory_space<vmem>>, %arg3: memref<1x512xf32, #tpu.memory_space<vmem>>, %arg4: memref<8x512xf32, #tpu.memory_space<vmem>>) attributes {dimension_semantics = [#tpu.dimension_semantics<parallel>], iteration_bounds = array<i64: 1>, scalar_prefetch = 0 : i64, scratch_operands = 0 : i64, tpu.core_type = #tpu.core_type<tc>, window_params = [{transform_indices = @transform_0, window_bounds = array<i64: 8, 64>}, {pipeline_mode = #tpu.pipeline_mode<synchronous>, transform_indices = @transform_1, window_bounds = array<i64: 64, 512>}, {pipeline_mode = #tpu.pipeline_mode<synchronous>, transform_indices = @transform_2, window_bounds = array<i64: 1, 512>}, {transform_indices = @transform_3, window_bounds = array<i64: 8, 512>}]} {
    %c0 = arith.constant 0 : index
    %c0_0 = arith.constant 0 : index
    %0 = vector.load %arg1[%c0, %c0_0] : memref<8x64xf32, #tpu.memory_space<vmem>>, vector<8x64xf32>
    %c0_1 = arith.constant 0 : index
    %c0_2 = arith.constant 0 : index
    %1 = vector.load %arg2[%c0_1, %c0_2] : memref<64x512xf32, #tpu.memory_space<vmem>>, vector<64x512xf32>
    %cst = arith.constant dense<0.000000e+00> : vector<8x512xf32>
    %2 = tpu.matmul %0, %1, %cst {dimension_numbers = #tpu.dot_dimension_numbers<[1], [0], [0], [1], [0, 0, 1, 1], [], []>} : vector<8x64xf32>, vector<64x512xf32>, vector<8x512xf32> -> vector<8x512xf32>
    %c0_3 = arith.constant 0 : index
    %c0_4 = arith.constant 0 : index
    %3 = vector.load %arg3[%c0_3, %c0_4] : memref<1x512xf32, #tpu.memory_space<vmem>>, vector<1x512xf32>
    %4 = vector.broadcast %3 : vector<1x512xf32> to vector<8x512xf32>
    %5 = arith.addf %2, %4 : vector<8x512xf32>
    %c0_5 = arith.constant 0 : index
    %c0_6 = arith.constant 0 : index
    %6 = vector.load %arg4[%c0_5, %c0_6] : memref<8x512xf32, #tpu.memory_space<vmem>>, vector<8x512xf32>
    tpu.vector_store %arg4[%c0_5, %c0_6], %5 {strides = array<i32>} : memref<8x512xf32, #tpu.memory_space<vmem>>, vector<8x512xf32>,
    return
  }
  func.func @transform_0(%arg0: i32) -> (i32, i32) {
    %c0_i32 = arith.constant 0 : i32
    %c0_i32_0 = arith.constant 0 : i32
    return %arg0, %c0_i32 : i32, i32
  }
  func.func @transform_1(%arg0: i32) -> (i32, i32) {
    %c0_i32 = arith.constant 0 : i32
    %c0_i32_0 = arith.constant 0 : i32
    %c0_i32_1 = arith.constant 0 : i32
    return %c0_i32, %c0_i32_0 : i32, i32
  }
  func.func @transform_2(%arg0: i32) -> (i32, i32) {
    %c0_i32 = arith.constant 0 : i32
    %c0_i32_0 = arith.constant 0 : i32
    %c0_i32_1 = arith.constant 0 : i32
    return %c0_i32, %c0_i32_0 : i32, i32
  }
  func.func @transform_3(%arg0: i32) -> (i32, i32) {
    %c0_i32 = arith.constant 0 : i32
    %c0_i32_0 = arith.constant 0 : i32
    return %arg0, %c0_i32 : i32, i32
  }
}

</mosaic_0001>

<llo_original>
// kernel: tpu_custom_call.1
$region0: #{tpu_custom_call.1}
  #allocation0 [shape = 'u32[]', space=smem, size = 0x4, offset = 0x4, fixed_abs, tag = 'smem constant byte address 0x4 - core index']
  #allocation1 [shape = 'u32[144,128]{1,0:T(1,128)}', space=vmem, size = 0x12000, scoped, tag = 'internal scratch']
  %s0 = inlined_call_operand.hbm [shape: f32[8,64], index: 0, kind: input, shape index: {}]
  %s1 = inlined_call_operand.hbm [shape: f32[64,512], index: 1, kind: input, shape index: {}]
  %s2 = inlined_call_operand.vmem [shape: f32[1,512], index: 2, kind: input, shape index: {}]
  %s3 = inlined_call_operand.hbm [shape: f32[8,512], index: 3, kind: output, shape index: {}]
  %s4 = sld [smem:[#allocation0]]
  $region30: #{tpu_custom_call.1} parent=0
    _
  %s6 = ssub.s32 1, %s4
  %s7 = scalar_select 0, %s6, %s4
  $region1: #{tpu_custom_call.1} parent=0
    #allocation2 [shape = 'u8[4096]{0}', space=vmem, size = 0x1000, scoped, tag = 'input window, operand 0, single buffered']
    #allocation3 [shape = 's32[1]{0}', space=sflag, size = 0x4, scoped, tag = 'scoped memory for tpu_custom_call.1']
    #allocation4 [shape = 's32[1]{0}', space=sflag, size = 0x4, scoped, tag = 'scoped memory for tpu_custom_call.1']
    #allocation5 [shape = 'u8[131072]{0}', space=vmem, size = 0x20000, scoped, tag = 'input window, operand 1, single buffered']
    #allocation6 [shape = 's32[1]{0}', space=sflag, size = 0x4, scoped, tag = 'scoped memory for tpu_custom_call.1']
    #allocation7 [shape = 'u8[16384]{0}', space=vmem, size = 0x4000, scoped, tag = 'output window, operand 0, single buffered']
    %8 = vsyncpa [#allocation3], 0
    %9 = vsyncpa [#allocation6], 0
    %10 = vsyncpa [#allocation4], 0
    // Predicated region
    $region2: #{tpu_custom_call.1} parent=1 // pred_check
      _
    $region3: #{tpu_custom_call.1} parent=1 // pred_check_branch
      %12 = sbr.rel (0) target = $region5
    $region4: #{tpu_custom_call.1} parent=1 // pred_region
      %s14 = ssub.s32 128, 128
      %15 = vsyncadd [#allocation3], %s14
      %s17 = sshll.u32 [#allocation2], 4
      %s18 = int_to_ptr.vmem [resolvable:$true] %s17
      %20 = dma.hbm_to_vmem [thread:$0]  %s0, 128, %s18, [#allocation3]
    $region5: #{tpu_custom_call.1} parent=1 // pred_fallthru
      _
    // Predicated region
    $region6: #{tpu_custom_call.1} parent=1 // pred_check
      _
    $region7: #{tpu_custom_call.1} parent=1 // pred_check_branch
      %22 = sbr.rel (0) target = $region9
    $region8: #{tpu_custom_call.1} parent=1 // pred_region
      %s24 = ssub.s32 4096, 4096
      %25 = vsyncadd [#allocation6], %s24
      %s26 = sshll.u32 [#allocation5], 4
      %s27 = int_to_ptr.vmem [resolvable:$true] %s26
      %32 = dma.hbm_to_vmem [thread:$0]  %s1, 4096, %s27, [#allocation6], 512, 512, 32
    $region9: #{tpu_custom_call.1} parent=1 // pred_fallthru
      _
    // Predicated region
    $region10: #{tpu_custom_call.1} parent=1 // pred_check
      _
    $region11: #{tpu_custom_call.1} parent=1 // pred_check_branch
      %34 = sbr.rel (0) target = $region13
    $region12: #{tpu_custom_call.1} parent=1 // pred_region
      _
    $region13: #{tpu_custom_call.1} parent=1 // pred_fallthru
      _
    // Predicated region
    $region14: #{tpu_custom_call.1} parent=1 // pred_check
      _
    $region15: #{tpu_custom_call.1} parent=1 // pred_check_branch
      %36 = sbr.rel (0) target = $region17
    $region16: #{tpu_custom_call.1} parent=1 // pred_region
      %37 = dma.done [#allocation3], 128
    $region17: #{tpu_custom_call.1} parent=1 // pred_fallthru
      _
    // Predicated region
    $region18: #{tpu_custom_call.1} parent=1 // pred_check
      _
    $region19: #{tpu_custom_call.1} parent=1 // pred_check_branch
      %39 = sbr.rel (0) target = $region21
    $region20: #{tpu_custom_call.1} parent=1 // pred_region
      %40 = dma.done [#allocation6], 4096
    $region21: #{tpu_custom_call.1} parent=1 // pred_fallthru
      _
    %v41 = vld [vmem:[#allocation2] sm:$0xff]
    %v42 = vld [vmem:[#allocation5] sm:$0xff]
    %v43 = vld [vmem:[#allocation5 + $0x8] sm:$0xff]
    %v44 = vld [vmem:[#allocation5 + $0x10] sm:$0xff]
    %v45 = vld [vmem:[#allocation5 + $0x18] sm:$0xff]
    %v46 = vld [vmem:[#allocation5 + $0x20] sm:$0xff]
    %v47 = vld [vmem:[#allocation5 + $0x28] sm:$0xff]
    %v48 = vld [vmem:[#allocation5 + $0x30] sm:$0xff]
    %v49 = vld [vmem:[#allocation5 + $0x38] sm:$0xff]
    %v50 = vld [vmem:[#allocation5 + $0x40] sm:$0xff]
    %v51 = vld [vmem:[#allocation5 + $0x48] sm:$0xff]
    %v52 = vld [vmem:[#allocation5 + $0x50] sm:$0xff]
    %v53 = vld [vmem:[#allocation5 + $0x58] sm:$0xff]
    %v54 = vld [vmem:[#allocation5 + $0x60] sm:$0xff]
    %v55 = vld [vmem:[#allocation5 + $0x68] sm:$0xff]
    %v56 = vld [vmem:[#allocation5 + $0x70] sm:$0xff]
    %v57 = vld [vmem:[#allocation5 + $0x78] sm:$0xff]
    %v58 = vld [vmem:[#allocation5 + $0x80] sm:$0xff]
    %v59 = vld [vmem:[#allocation5 + $0x88] sm:$0xff]
    %v60 = vld [vmem:[#allocation5 + $0x90] sm:$0xff]
    %v61 = vld [vmem:[#allocation5 + $0x98] sm:$0xff]
    %v62 = vld [vmem:[#allocation5 + $0xa0] sm:$0xff]
    %v63 = vld [vmem:[#allocation5 + $0xa8] sm:$0xff]
    %v64 = vld [vmem:[#allocation5 + $0xb0] sm:$0xff]
    %v65 = vld [vmem:[#allocation5 + $0xb8] sm:$0xff]
    %v66 = vld [vmem:[#allocation5 + $0xc0] sm:$0xff]
    %v67 = vld [vmem:[#allocation5 + $0xc8] sm:$0xff]
    %v68 = vld [vmem:[#allocation5 + $0xd0] sm:$0xff]
    %v69 = vld [vmem:[#allocation5 + $0xd8] sm:$0xff]
    %v70 = vld [vmem:[#allocation5 + $0xe0] sm:$0xff]
    %v71 = vld [vmem:[#allocation5 + $0xe8] sm:$0xff]
    %v72 = vld [vmem:[#allocation5 + $0xf0] sm:$0xff]
    %v73 = vld [vmem:[#allocation5 + $0xf8] sm:$0xff]
    %v74 = vld [vmem:[%s2] sm:$0xf]
    %v76 = vlaneseq
    %v77 = vshrl.u32 %v76, 7
    %v78 = vsub.s32 0, %v77
    %v79 = vrot.slane %v74, %v78
    %v80 = vlaneseq
    %v81 = vshrl.u32 %v80, 7
    %v82 = vsub.s32 1, %v81
    %v83 = vrot.slane %v74, %v82
    %v84 = vlaneseq
    %v85 = vshrl.u32 %v84, 7
    %v86 = vsub.s32 2, %v85
    %v87 = vrot.slane %v74, %v86
    %v88 = vlaneseq
    %v89 = vshrl.u32 %v88, 7
    %v90 = vsub.s32 3, %v89
    %v91 = vrot.slane %v74, %v90
    %vm96 = vcmask 523264
    %v98 = vsel %vm96, %v41, 0
    %100 = vmatprep.subr.mxu0 %v43
    %101 = vmatpush1.msra.mxu0 %v42
    %102 = vmatprep.subr.mxu0 %v47
    %103 = vmatpush1.msra.mxu0 %v46
    %104 = vmatprep.subr.mxu0 %v51
    %105 = vmatpush1.msra.mxu0 %v50
    %106 = vmatprep.subr.mxu0 %v55
    %107 = vmatpush1.msra.mxu0 %v54
    %108 = vmatprep.subr.mxu0 %v59
    %109 = vmatpush1.msra.mxu0 %v58
    %110 = vmatprep.subr.mxu0 %v63
    %111 = vmatpush1.msra.mxu0 %v62
    %112 = vmatprep.subr.mxu0 %v67
    %113 = vmatpush1.msra.mxu0 %v66
    %114 = vmatprep.subr.mxu0 %v71
    %115 = vmatpush1.msra.mxu0 %v70
    %116 = vmatprep.subr.mxu0 0.0
    %117 = vmatpush1.msra.mxu0 0.0
    %118 = vmatprep.subr.mxu0 0.0
    %119 = vmatpush1.msra.mxu0 0.0
    %120 = vmatprep.subr.mxu0 0.0
    %121 = vmatpush1.msra.mxu0 0.0
    %122 = vmatprep.subr.mxu0 0.0
    %123 = vmatpush1.msra.mxu0 0.0
    %124 = vmatprep.subr.mxu0 0.0
    %125 = vmatpush1.msra.mxu0 0.0
    %126 = vmatprep.subr.mxu0 0.0
    %127 = vmatpush1.msra.mxu0 0.0
    %128 = vmatprep.subr.mxu0 0.0
    %129 = vmatpush1.msra.mxu0 0.0
    %130 = vmatprep.subr.mxu0 0.0
    %131 = vmatpush1.msra.mxu0 0.0
    %132 = vmatprep.subr.mxu0 0.0
    %133 = vmatpush1.msra.mxu0 0.0
    %134 = vmatprep.subr.mxu0 0.0
    %135 = vmatpush1.msra.mxu0 0.0
    %136 = vmatprep.subr.mxu0 0.0
    %137 = vmatpush1.msra.mxu0 0.0
    %138 = vmatprep.subr.mxu0 0.0
    %139 = vmatpush1.msra.mxu0 0.0
    %140 = vmatprep.subr.mxu0 0.0
    %141 = vmatpush1.msra.mxu0 0.0
    %142 = vmatprep.subr.mxu0 0.0
    %143 = vmatpush1.msra.mxu0 0.0
    %144 = vmatprep.subr.mxu0 0.0
    %145 = vmatpush1.msra.mxu0 0.0
    %146 = vmatprep.subr.mxu0 0.0
    %147 = vmatpush1.msra.mxu0 0.0
    %148 = vmatprep.subr.mxu0 0.0
    %149 = vmatpush1.msra.mxu0 0.0
    %150 = vmatprep.subr.mxu0 0.0
    %151 = vmatpush1.msra.mxu0 0.0
    %152 = vmatprep.subr.mxu0 0.0
    %153 = vmatpush1.msra.mxu0 0.0
    %154 = vmatprep.subr.mxu0 0.0
    %155 = vmatpush1.msra.mxu0 0.0
    %156 = vmatprep.subr.mxu0 0.0
    %157 = vmatpush1.msra.mxu0 0.0
    %158 = vmatprep.subr.mxu0 0.0
    %159 = vmatpush1.msra.mxu0 0.0
    %160 = vmatprep.subr.mxu0 0.0
    %161 = vmatpush1.msra.mxu0 0.0
    %162 = vmatprep.subr.mxu0 0.0
    %163 = vmatpush1.msra.mxu0 0.0
    %164 = vmatprep.mubr.f32.mxu0 0.0
    %165 = vmatmul.mubr.f32.gmra.mrb[0].mxu0 %v98
    %v166 = vpop.f32.mrb[0].mxu0
    %v167 = vadd.f32 %v79, %v166
    %v168 = vpop.f32.mrb[0].mxu0
    %v169 = vadd.f32 %v83, %v168
    %170 = vdwg.mxu0
    %171 = vmatprep.subr.mxu0 %v45
    %172 = vmatpush1.msra.mxu0 %v44
    %173 = vmatprep.subr.mxu0 %v49
    %174 = vmatpush1.msra.mxu0 %v48
    %175 = vmatprep.subr.mxu0 %v53
    %176 = vmatpush1.msra.mxu0 %v52
    %177 = vmatprep.subr.mxu0 %v57
    %178 = vmatpush1.msra.mxu0 %v56
    %179 = vmatprep.subr.mxu0 %v61
    %180 = vmatpush1.msra.mxu0 %v60
    %181 = vmatprep.subr.mxu0 %v65
    %182 = vmatpush1.msra.mxu0 %v64
    %183 = vmatprep.subr.mxu0 %v69
    %184 = vmatpush1.msra.mxu0 %v68
    %185 = vmatprep.subr.mxu0 %v73
    %186 = vmatpush1.msra.mxu0 %v72
    %187 = vmatprep.subr.mxu0 0.0
    %188 = vmatpush1.msra.mxu0 0.0
    %189 = vmatprep.subr.mxu0 0.0
    %190 = vmatpush1.msra.mxu0 0.0
    %191 = vmatprep.subr.mxu0 0.0
    %192 = vmatpush1.msra.mxu0 0.0
    %193 = vmatprep.subr.mxu0 0.0
    %194 = vmatpush1.msra.mxu0 0.0
    %195 = vmatprep.subr.mxu0 0.0
    %196 = vmatpush1.msra.mxu0 0.0
    %197 = vmatprep.subr.mxu0 0.0
    %198 = vmatpush1.msra.mxu0 0.0
    %199 = vmatprep.subr.mxu0 0.0
    %200 = vmatpush1.msra.mxu0 0.0
    %201 = vmatprep.subr.mxu0 0.0
    %202 = vmatpush1.msra.mxu0 0.0
    %203 = vmatprep.subr.mxu0 0.0
    %204 = vmatpush1.msra.mxu0 0.0
    %205 = vmatprep.subr.mxu0 0.0
    %206 = vmatpush1.msra.mxu0 0.0
    %207 = vmatprep.subr.mxu0 0.0
    %208 = vmatpush1.msra.mxu0 0.0
    %209 = vmatprep.subr.mxu0 0.0
    %210 = vmatpush1.msra.mxu0 0.0
    %211 = vmatprep.subr.mxu0 0.0
    %212 = vmatpush1.msra.mxu0 0.0
    %213 = vmatprep.subr.mxu0 0.0
    %214 = vmatpush1.msra.mxu0 0.0
    %215 = vmatprep.subr.mxu0 0.0
    %216 = vmatpush1.msra.mxu0 0.0
    %217 = vmatprep.subr.mxu0 0.0
    %218 = vmatpush1.msra.mxu0 0.0
    %219 = vmatprep.subr.mxu0 0.0
    %220 = vmatpush1.msra.mxu0 0.0
    %221 = vmatprep.subr.mxu0 0.0
    %222 = vmatpush1.msra.mxu0 0.0
    %223 = vmatprep.subr.mxu0 0.0
    %224 = vmatpush1.msra.mxu0 0.0
    %225 = vmatprep.subr.mxu0 0.0
    %226 = vmatpush1.msra.mxu0 0.0
    %227 = vmatprep.subr.mxu0 0.0
    %228 = vmatpush1.msra.mxu0 0.0
    %229 = vmatprep.subr.mxu0 0.0
    %230 = vmatpush1.msra.mxu0 0.0
    %231 = vmatprep.subr.mxu0 0.0
    %232 = vmatpush1.msra.mxu0 0.0
    %233 = vmatprep.subr.mxu0 0.0
    %234 = vmatpush1.msra.mxu0 0.0
    %235 = vmatprep.mubr.f32.mxu0 0.0
    %236 = vmatmul.mubr.f32.gmra.mrb[0].mxu0 %v98
    %v237 = vpop.f32.mrb[0].mxu0
    %v238 = vadd.f32 %v87, %v237
    %v239 = vpop.f32.mrb[0].mxu0
    %v240 = vadd.f32 %v91, %v239
    %241 = vdwg.mxu0
    %242 = vst [vmem:[#allocation7] sm:$0xff] %v167
    %243 = vst [vmem:[#allocation7 + $0x8] sm:$0xff] %v169
    %244 = vst [vmem:[#allocation7 + $0x10] sm:$0xff] %v238
    %245 = vst [vmem:[#allocation7 + $0x18] sm:$0xff] %v240
    // Predicated region
    $region22: #{tpu_custom_call.1} parent=1 // pred_check
      _
    $region23: #{tpu_custom_call.1} parent=1 // pred_check_branch
      %247 = sbr.rel (0) target = $region25
    $region24: #{tpu_custom_call.1} parent=1 // pred_region
      %s249 = ssub.s32 512, 512
      %250 = vsyncadd [#allocation4], %s249
      %s252 = sshll.u32 [#allocation7], 4
      %s253 = int_to_ptr.vmem [resolvable:$true] %s252
      %255 = dma.vmem_to_hbm [thread:$0]  %s253, 512, %s3, [#allocation4]
    $region25: #{tpu_custom_call.1} parent=1 // pred_fallthru
      _
    // Predicated region
    $region26: #{tpu_custom_call.1} parent=1 // pred_check
      _
    $region27: #{tpu_custom_call.1} parent=1 // pred_check_branch
      %257 = sbr.rel (0) target = $region29
    $region28: #{tpu_custom_call.1} parent=1 // pred_region
      %258 = dma.done [#allocation4], 512
    $region29: #{tpu_custom_call.1} parent=1 // pred_fallthru
      _
    %259 = vsyncpa [#allocation3], 1
    %260 = vsyncpa [#allocation6], 1
    %261 = vsyncpa [#allocation4], 1

</llo_original>
